<compile_context>
chip_gen: v7x
topology: tpu7x:2x2x1
jax: 0.10.0
libtpu: 0.0.40
codegen_flags: <defaults>
</compile_context>

<pallas_src>
import functools

import jax
import jax.numpy as jnp
from jax.experimental import pallas as pl
from jax.experimental.pallas import tpu as pltpu

DIMENSION = 2
DEFAULT_LANE_WIDTH = 512    # lane (last) axis of a block, multiple of 128
DEFAULT_TILE_ROWS = 1024    # sublane axis of a block, multiple of 8
# -> 512K points / block: 4 MiB input + 2 MiB output per buffer.


def _round_up(a, b):
    return ((a + b - 1) // b) * b


def _dnn_forward_kernel(x_ref, o_ref):
    # x_ref: (DIMENSION, tile_rows, lane_width) VMEM
    # o_ref: (tile_rows, lane_width) VMEM
    four_pi = 4.0 * jnp.pi
    s0 = jnp.sin(four_pi * x_ref[0])   # (tile_rows, lane_width), EUP
    s1 = jnp.sin(four_pi * x_ref[1])
    o_ref[...] = -(s0 * s1)            # product over the coordinate axis


@functools.partial(jax.jit, static_argnames=("lane_width", "tile_rows"))
def dnn_forward(x, *, lane_width=DEFAULT_LANE_WIDTH, tile_rows=DEFAULT_TILE_ROWS):
    """Pallas implementation of DNN.forward:
        -prod(sin(4*pi*x), axis=1).reshape(-1, 1)
    Accepts x of shape (N, DIMENSION) like the torch module.
    """
    n, d = x.shape
    assert d == DIMENSION
    x = x.astype(jnp.float32)

    # Shrink block dims for small problems; keep (8, 128) alignment.
    lane_width = min(lane_width, _round_up(max(n, 1), 128))
    tile_rows = min(tile_rows, _round_up(pl.cdiv(max(n, 1), lane_width), 8))
    block_points = lane_width * tile_rows
    n_pad = _round_up(n, block_points)
    rows = n_pad // lane_width
    grid = (rows // tile_rows,)

    # One real copy: (N, D) -> lane-dense (D, N); pad + split are fused/free.
    xt = jnp.transpose(x)                                    # (D, N)
    if n_pad != n:
        xt = jnp.pad(xt, ((0, 0), (0, n_pad - n)))
    xt = xt.reshape(DIMENSION, rows, lane_width)             # contiguous split

    out = pl.pallas_call(
        _dnn_forward_kernel,
        out_shape=jax.ShapeDtypeStruct((rows, lane_width), jnp.float32),
        grid_spec=pltpu.PrefetchScalarGridSpec(
            num_scalar_prefetch=0,
            grid=grid,
            in_specs=[
                pl.BlockSpec((DIMENSION, tile_rows, lane_width),
                             lambda i: (0, i, 0)),
            ],
            out_specs=pl.BlockSpec((tile_rows, lane_width), lambda i: (i, 0)),
        ),
        compiler_params=pltpu.CompilerParams(
            dimension_semantics=("parallel",),
        ),
    )(xt)                                                    # (rows, lane_width)

    return out.reshape(n_pad, 1)[:n]                         # (N, 1)


def dnn_forward_ref(x):
    x = x.astype(jnp.float32)
    return -jnp.prod(jnp.sin(4.0 * jnp.pi * x), axis=1).reshape(-1, 1)


if __name__ == "__main__":
    key = jax.random.PRNGKey(0)

    # Small input consistent with the module: N collocation points, dimension=2.
    N = 256
    x = jax.random.uniform(key, (N, DIMENSION), jnp.float32)

    out = dnn_forward(x)
    out = jax.block_until_ready(out)

    ref = dnn_forward_ref(x)
    assert out.shape == (N, 1)
    assert jnp.allclose(out, ref, atol=1e-5, rtol=1e-5), "mismatch vs reference"

    print("KERNEL_OK")
</pallas_src>

<mosaic_0001>
module attributes {stable_mosaic.version = 11 : i64} {
  func.func @_dnn_forward_kernel(%arg0: i32, %arg1: memref<2x8x256xf32, #tpu.memory_space<vmem>>, %arg2: memref<8x256xf32, #tpu.memory_space<vmem>>) attributes {dimension_semantics = [#tpu.dimension_semantics<parallel>], iteration_bounds = array<i64: 1>, scalar_prefetch = 0 : i64, scratch_operands = 0 : i64, tpu.core_type = #tpu.core_type<tc>, window_params = [{transform_indices = @transform_0, window_bounds = array<i64: 2, 8, 256>}, {transform_indices = @transform_1, window_bounds = array<i64: 8, 256>}]} {
    %c0 = arith.constant 0 : index
    %c0_0 = arith.constant 0 : index
    %c0_1 = arith.constant 0 : index
    %0 = vector.load %arg1[%c0, %c0_0, %c0_1] : memref<2x8x256xf32, #tpu.memory_space<vmem>>, vector<1x8x256xf32>
    %1 = vector.shape_cast %0 : vector<1x8x256xf32> to vector<8x256xf32>
    %cst = arith.constant 12.566371 : f32
    %2 = vector.broadcast %cst : f32 to vector<8x256xf32>
    %3 = arith.mulf %2, %1 : vector<8x256xf32>
    %4 = math.sin %3 : vector<8x256xf32>
    %c1 = arith.constant 1 : index
    %c0_2 = arith.constant 0 : index
    %c0_3 = arith.constant 0 : index
    %5 = vector.load %arg1[%c1, %c0_2, %c0_3] : memref<2x8x256xf32, #tpu.memory_space<vmem>>, vector<1x8x256xf32>
    %6 = vector.shape_cast %5 : vector<1x8x256xf32> to vector<8x256xf32>
    %cst_4 = arith.constant 12.566371 : f32
    %7 = vector.broadcast %cst_4 : f32 to vector<8x256xf32>
    %8 = arith.mulf %7, %6 : vector<8x256xf32>
    %9 = math.sin %8 : vector<8x256xf32>
    %10 = arith.mulf %4, %9 : vector<8x256xf32>
    %cst_5 = arith.constant 0.000000e+00 : f32
    %11 = vector.broadcast %cst_5 : f32 to vector<8x256xf32>
    %12 = arith.subf %11, %10 : vector<8x256xf32>
    %c0_6 = arith.constant 0 : index
    %c0_7 = arith.constant 0 : index
    %13 = vector.load %arg2[%c0_6, %c0_7] : memref<8x256xf32, #tpu.memory_space<vmem>>, vector<8x256xf32>
    tpu.vector_store %arg2[%c0_6, %c0_7], %12 {strides = array<i32>} : memref<8x256xf32, #tpu.memory_space<vmem>>, vector<8x256xf32>,
    return
  }
  func.func @transform_0(%arg0: i32) -> (i32, i32, i32) {
    %c0_i32 = arith.constant 0 : i32
    %c0_i32_0 = arith.constant 0 : i32
    %c0_i32_1 = arith.constant 0 : i32
    return %c0_i32, %arg0, %c0_i32_0 : i32, i32, i32
  }
  func.func @transform_1(%arg0: i32) -> (i32, i32) {
    %c0_i32 = arith.constant 0 : i32
    %c0_i32_0 = arith.constant 0 : i32
    return %arg0, %c0_i32 : i32, i32
  }
}

</mosaic_0001>

<llo_original>
// kernel: dnn_forward.1
$region0: #{dnn_forward.1}
  #allocation0 [shape = 'u32[]', space=smem, size = 0x4, offset = 0x4, fixed_abs, tag = 'smem constant byte address 0x4 - core index']
  #allocation1 [shape = 'u32[144,128]{1,0:T(1,128)}', space=vmem, size = 0x12000, scoped, tag = 'internal scratch']
  %s0 = inlined_call_operand.vmem [shape: f32[2,8,256], index: 0, kind: input, shape index: {}]
  %s1 = inlined_call_operand.vmem [shape: f32[8,256], index: 1, kind: output, shape index: {}]
  %s2 = sld [smem:[#allocation0]]
  $region14: #{dnn_forward.1} parent=0
    _
  %s4 = ssub.s32 1, %s2
  %s5 = scalar_select 0, %s4, %s2
  // Predicated region
  $region2: #{dnn_forward.1} parent=0 // pred_check
    _
  $region3: #{dnn_forward.1} parent=0 // pred_check_branch
    %7 = sbr.rel (0) target = $region5
  $region4: #{dnn_forward.1} parent=0 // pred_region
    _
  $region5: #{dnn_forward.1} parent=0 // pred_fallthru
    _
  %v8 = vld [vmem:[%s0] sm:$0xff]
  %v9 = vld [vmem:[%s0 + $0x8] sm:$0xff]
  %v10 = vmul.f32 %v8, 12.566371
  %v11 = vmul.f32 %v9, 12.566371
  %v12 = vand.u32 2147483647, %v10
  %vm13 = vcmp.le.f32.partialorder %v12, 0.7853982
  %vm14 = vcmp.lt.s32.totalorder %v10, 0
  %v15 = vand.u32 %v10, 2139095040
  %v16 = vshrl.u32 %v15, 23
  %v17 = vsub.s32 %v16, 127
  %v18 = vand.u32 2147483647, %v10
  %v19 = vand.u32 %v18, 8388607
  %v20 = vor.u32 %v19, 8388608
  %v21 = vsub.s32 0, %v20
  %v22 = vadd.s32 %v17, 1
  %vm23 = vcmp.gt.s32.totalorder %v22, 0
  %v24 = vsel %vm23, %v22, 0
  %v25 = vshrl.u32 %v24, 5
  %v26 = vand.u32 %v24, 31
  %v27 = vsub.s32 32, %v26
  %v28 = vshrl.u32 683565275, %v27
  %v29 = vshll.u32 683565275, %v26
  %v30 = vshrl.u32 2475754826, %v27
  %v31 = vor.u32 %v29, %v30
  %v32 = vshll.u32 2475754826, %v26
  %v33 = vshrl.u32 2131351028, %v27
  %v34 = vor.u32 %v32, %v33
  %v35 = vshll.u32 2131351028, %v26
  %v36 = vshrl.u32 2102212464, %v27
  %v37 = vor.u32 %v35, %v36
  %v38 = vshll.u32 2102212464, %v26
  %v39 = vshrl.u32 920167782, %v27
  %v40 = vor.u32 %v38, %v39
  %v41 = vshll.u32 920167782, %v26
  %v42 = vshrl.u32 1326507024, %v27
  %v43 = vor.u32 %v41, %v42
  %vm44 = vcmp.lt.s32.totalorder %v25, 1
  %vm45 = vcmp.lt.s32.totalorder %v25, 2
  %vm46 = vcmp.lt.s32.totalorder %v25, 3
  %vm47 = vcmp.lt.s32.totalorder %v25, 4
  %v48 = vsel %vm44, %v28, %v31
  %v49 = vsel %vm47, %v37, 2102212464
  %v50 = vsel %vm46, %v34, %v49
  %v51 = vsel %vm45, %v48, %v50
  %v52 = vsel %vm44, %v31, %v34
  %v53 = vsel %vm47, %v40, 920167782
  %v54 = vsel %vm46, %v37, %v53
  %v55 = vsel %vm45, %v52, %v54
  %v56 = vsel %vm44, %v34, %v37
  %v57 = vsel %vm47, %v43, 1326507024
  %v58 = vsel %vm46, %v40, %v57
  %v59 = vsel %vm45, %v56, %v58
  %v60 = vshll.u32 %v20, 8
  %v61 = vmul.u32.u64.compose %v60, %v59
  %v62 = vextract.low.u32 %v61
  %v63 = vextract.high.u32 %v61
  %v64 = vmul.u32.u64.compose %v60, %v55
  %v65 = vextract.low.u32 %v64
  %v66 = vextract.high.u32 %v64
  %v67 = vmul.u32 %v60, %v51
  %v68 = vadd.s32 %v63, %v65
  %vm69 = vc.u32 %v63, %v65
  %v70 = vadd.s32 %v66, 1
  %v71 = vsel %vm69, %v70, %v66
  %v72 = vadd.s32 %v67, %v71
  %v73 = vadd.s32 %v72, 536870912
  %v74 = vshrl.u32 %v73, 30
  %v75 = vshll.u32 %v74, 30
  %v76 = vsub.s32 %v72, %v75
  %vm77 = vcmp.lt.s32.totalorder %v76, 0
  %v78 = vsub.s32 0, %v76
  %v79 = vsel %vm77, %v78, %v76
  %v80 = vclz %v79
  %v81 = vsub.s32 %v80, 2
  %vm82 = vcmp.gt.s32.totalorder 0, %v81
  %v83 = vsel %vm82, 0, %v81
  %v84 = vsub.s32 32, %v83
  %v85 = vshll.u32 %v76, %v83
  %v86 = vshrl.u32 %v68, %v84
  %v87 = vor.u32 %v85, %v86
  %v88 = vsub.s32 4294967266, %v83
  %v89 = vadd.s32 %v88, 127
  %v90 = vshll.u32 %v89, 23
  %v91 = vor.u32 4788187, %v90
  %v92 = vand.u32 2147483647, %v91
  %v94 = vcvt.s32.f32 %v87
  %v95 = vmul.f32 %v94, %v92
  %v96 = vxor.u32 %v95, 2147483648
  %v97 = vsel %vm14, %v96, %v95
  %v98 = vsub.s32 4, %v74
  %v99 = vsel %vm14, %v98, %v74
  %v100 = vsel %vm13, %v10, %v97
  %v101 = vsel %vm13, 0, %v99
  %v102 = vcosq.f32.pop %v100
  %v103 = vsinq.f32.pop %v100
  %vm104 = vweird.f32 %v10
  %v105 = vadd.s32 %v101, 3
  %v106 = vand.u32 %v105, 3
  %vm107 = vcmp.lt.s32.totalorder %v106, 2
  %vm108 = vcmp.eq.s32.totalorder %v106, 0
  %v109 = vxor.u32 %v103, 2147483648
  %v110 = vsel %vm108, %v102, %v109
  %vm111 = vcmp.eq.s32.totalorder %v106, 2
  %v112 = vxor.u32 %v102, 2147483648
  %v113 = vsel %vm111, %v112, %v103
  %v114 = vsel %vm107, %v110, %v113
  %v115 = vsel %vm104, nan, %v114
  %v116 = vand.u32 2147483647, %v11
  %vm117 = vcmp.le.f32.partialorder %v116, 0.7853982
  %vm118 = vcmp.lt.s32.totalorder %v11, 0
  %v119 = vand.u32 %v11, 2139095040
  %v120 = vshrl.u32 %v119, 23
  %v121 = vsub.s32 %v120, 127
  %v122 = vand.u32 2147483647, %v11
  %v123 = vand.u32 %v122, 8388607
  %v124 = vor.u32 %v123, 8388608
  %v125 = vsub.s32 0, %v124
  %v126 = vadd.s32 %v121, 1
  %vm127 = vcmp.gt.s32.totalorder %v126, 0
  %v128 = vsel %vm127, %v126, 0
  %v129 = vshrl.u32 %v128, 5
  %v130 = vand.u32 %v128, 31
  %v131 = vsub.s32 32, %v130
  %v132 = vshrl.u32 683565275, %v131
  %v133 = vshll.u32 683565275, %v130
  %v134 = vshrl.u32 2475754826, %v131
  %v135 = vor.u32 %v133, %v134
  %v136 = vshll.u32 2475754826, %v130
  %v137 = vshrl.u32 2131351028, %v131
  %v138 = vor.u32 %v136, %v137
  %v139 = vshll.u32 2131351028, %v130
  %v140 = vshrl.u32 2102212464, %v131
  %v141 = vor.u32 %v139, %v140
  %v142 = vshll.u32 2102212464, %v130
  %v143 = vshrl.u32 920167782, %v131
  %v144 = vor.u32 %v142, %v143
  %v145 = vshll.u32 920167782, %v130
  %v146 = vshrl.u32 1326507024, %v131
  %v147 = vor.u32 %v145, %v146
  %vm148 = vcmp.lt.s32.totalorder %v129, 1
  %vm149 = vcmp.lt.s32.totalorder %v129, 2
  %vm150 = vcmp.lt.s32.totalorder %v129, 3
  %vm151 = vcmp.lt.s32.totalorder %v129, 4
  %v152 = vsel %vm148, %v132, %v135
  %v153 = vsel %vm151, %v141, 2102212464
  %v154 = vsel %vm150, %v138, %v153
  %v155 = vsel %vm149, %v152, %v154
  %v156 = vsel %vm148, %v135, %v138
  %v157 = vsel %vm151, %v144, 920167782
  %v158 = vsel %vm150, %v141, %v157
  %v159 = vsel %vm149, %v156, %v158
  %v160 = vsel %vm148, %v138, %v141
  %v161 = vsel %vm151, %v147, 1326507024
  %v162 = vsel %vm150, %v144, %v161
  %v163 = vsel %vm149, %v160, %v162
  %v164 = vshll.u32 %v124, 8
  %v165 = vmul.u32.u64.compose %v164, %v163
  %v166 = vextract.low.u32 %v165
  %v167 = vextract.high.u32 %v165
  %v168 = vmul.u32.u64.compose %v164, %v159
  %v169 = vextract.low.u32 %v168
  %v170 = vextract.high.u32 %v168
  %v171 = vmul.u32 %v164, %v155
  %v172 = vadd.s32 %v167, %v169
  %vm173 = vc.u32 %v167, %v169
  %v174 = vadd.s32 %v170, 1
  %v175 = vsel %vm173, %v174, %v170
  %v176 = vadd.s32 %v171, %v175
  %v177 = vadd.s32 %v176, 536870912
  %v178 = vshrl.u32 %v177, 30
  %v179 = vshll.u32 %v178, 30
  %v180 = vsub.s32 %v176, %v179
  %vm181 = vcmp.lt.s32.totalorder %v180, 0
  %v182 = vsub.s32 0, %v180
  %v183 = vsel %vm181, %v182, %v180
  %v184 = vclz %v183
  %v185 = vsub.s32 %v184, 2
  %vm186 = vcmp.gt.s32.totalorder 0, %v185
  %v187 = vsel %vm186, 0, %v185
  %v188 = vsub.s32 32, %v187
  %v189 = vshll.u32 %v180, %v187
  %v190 = vshrl.u32 %v172, %v188
  %v191 = vor.u32 %v189, %v190
  %v192 = vsub.s32 4294967266, %v187
  %v193 = vadd.s32 %v192, 127
  %v194 = vshll.u32 %v193, 23
  %v195 = vor.u32 4788187, %v194
  %v196 = vand.u32 2147483647, %v195
  %v198 = vcvt.s32.f32 %v191
  %v199 = vmul.f32 %v198, %v196
  %v200 = vxor.u32 %v199, 2147483648
  %v201 = vsel %vm118, %v200, %v199
  %v202 = vsub.s32 4, %v178
  %v203 = vsel %vm118, %v202, %v178
  %v204 = vsel %vm117, %v11, %v201
  %v205 = vsel %vm117, 0, %v203
  %v206 = vcosq.f32.pop %v204
  %v207 = vsinq.f32.pop %v204
  %vm208 = vweird.f32 %v11
  %v209 = vadd.s32 %v205, 3
  %v210 = vand.u32 %v209, 3
  %vm211 = vcmp.lt.s32.totalorder %v210, 2
  %vm212 = vcmp.eq.s32.totalorder %v210, 0
  %v213 = vxor.u32 %v207, 2147483648
  %v214 = vsel %vm212, %v206, %v213
  %vm215 = vcmp.eq.s32.totalorder %v210, 2
  %v216 = vxor.u32 %v206, 2147483648
  %v217 = vsel %vm215, %v216, %v207
  %v218 = vsel %vm211, %v214, %v217
  %v219 = vsel %vm208, nan, %v218
  %s220 = scalar_lea.vmem %s0, 16
  %v221 = vld [vmem:[%s220] sm:$0xff]
  %v222 = vld [vmem:[%s220 + $0x8] sm:$0xff]
  %v223 = vmul.f32 %v221, 12.566371
  %v224 = vmul.f32 %v222, 12.566371
  %v225 = vand.u32 2147483647, %v223
  %vm226 = vcmp.le.f32.partialorder %v225, 0.7853982
  %vm227 = vcmp.lt.s32.totalorder %v223, 0
  %v228 = vand.u32 %v223, 2139095040
  %v229 = vshrl.u32 %v228, 23
  %v230 = vsub.s32 %v229, 127
  %v231 = vand.u32 2147483647, %v223
  %v232 = vand.u32 %v231, 8388607
  %v233 = vor.u32 %v232, 8388608
  %v234 = vsub.s32 0, %v233
  %v235 = vadd.s32 %v230, 1
  %vm236 = vcmp.gt.s32.totalorder %v235, 0
  %v237 = vsel %vm236, %v235, 0
  %v238 = vshrl.u32 %v237, 5
  %v239 = vand.u32 %v237, 31
  %v240 = vsub.s32 32, %v239
  %v241 = vshrl.u32 683565275, %v240
  %v242 = vshll.u32 683565275, %v239
  %v243 = vshrl.u32 2475754826, %v240
  %v244 = vor.u32 %v242, %v243
  %v245 = vshll.u32 2475754826, %v239
  %v246 = vshrl.u32 2131351028, %v240
  %v247 = vor.u32 %v245, %v246
  %v248 = vshll.u32 2131351028, %v239
  %v249 = vshrl.u32 2102212464, %v240
  %v250 = vor.u32 %v248, %v249
  %v251 = vshll.u32 2102212464, %v239
  %v252 = vshrl.u32 920167782, %v240
  %v253 = vor.u32 %v251, %v252
  %v254 = vshll.u32 920167782, %v239
  %v255 = vshrl.u32 1326507024, %v240
  %v256 = vor.u32 %v254, %v255
  %vm257 = vcmp.lt.s32.totalorder %v238, 1
  %vm258 = vcmp.lt.s32.totalorder %v238, 2
  %vm259 = vcmp.lt.s32.totalorder %v238, 3
  %vm260 = vcmp.lt.s32.totalorder %v238, 4
  %v261 = vsel %vm257, %v241, %v244
  %v262 = vsel %vm260, %v250, 2102212464
  %v263 = vsel %vm259, %v247, %v262
  %v264 = vsel %vm258, %v261, %v263
  %v265 = vsel %vm257, %v244, %v247
  %v266 = vsel %vm260, %v253, 920167782
  %v267 = vsel %vm259, %v250, %v266
  %v268 = vsel %vm258, %v265, %v267
  %v269 = vsel %vm257, %v247, %v250
  %v270 = vsel %vm260, %v256, 1326507024
  %v271 = vsel %vm259, %v253, %v270
  %v272 = vsel %vm258, %v269, %v271
  %v273 = vshll.u32 %v233, 8
  %v274 = vmul.u32.u64.compose %v273, %v272
  %v275 = vextract.low.u32 %v274
  %v276 = vextract.high.u32 %v274
  %v277 = vmul.u32.u64.compose %v273, %v268
  %v278 = vextract.low.u32 %v277
  %v279 = vextract.high.u32 %v277
  %v280 = vmul.u32 %v273, %v264
  %v281 = vadd.s32 %v276, %v278
  %vm282 = vc.u32 %v276, %v278
  %v283 = vadd.s32 %v279, 1
  %v284 = vsel %vm282, %v283, %v279
  %v285 = vadd.s32 %v280, %v284
  %v286 = vadd.s32 %v285, 536870912
  %v287 = vshrl.u32 %v286, 30
  %v288 = vshll.u32 %v287, 30
  %v289 = vsub.s32 %v285, %v288
  %vm290 = vcmp.lt.s32.totalorder %v289, 0
  %v291 = vsub.s32 0, %v289
  %v292 = vsel %vm290, %v291, %v289
  %v293 = vclz %v292
  %v294 = vsub.s32 %v293, 2
  %vm295 = vcmp.gt.s32.totalorder 0, %v294
  %v296 = vsel %vm295, 0, %v294
  %v297 = vsub.s32 32, %v296
  %v298 = vshll.u32 %v289, %v296
  %v299 = vshrl.u32 %v281, %v297
  %v300 = vor.u32 %v298, %v299
  %v301 = vsub.s32 4294967266, %v296
  %v302 = vadd.s32 %v301, 127
  %v303 = vshll.u32 %v302, 23
  %v304 = vor.u32 4788187, %v303
  %v305 = vand.u32 2147483647, %v304
  %v307 = vcvt.s32.f32 %v300
  %v308 = vmul.f32 %v307, %v305
  %v309 = vxor.u32 %v308, 2147483648
  %v310 = vsel %vm227, %v309, %v308
  %v311 = vsub.s32 4, %v287
  %v312 = vsel %vm227, %v311, %v287
  %v313 = vsel %vm226, %v223, %v310
  %v314 = vsel %vm226, 0, %v312
  %v315 = vcosq.f32.pop %v313
  %v316 = vsinq.f32.pop %v313
  %vm317 = vweird.f32 %v223
  %v318 = vadd.s32 %v314, 3
  %v319 = vand.u32 %v318, 3
  %vm320 = vcmp.lt.s32.totalorder %v319, 2
  %vm321 = vcmp.eq.s32.totalorder %v319, 0
  %v322 = vxor.u32 %v316, 2147483648
  %v323 = vsel %vm321, %v315, %v322
  %vm324 = vcmp.eq.s32.totalorder %v319, 2
  %v325 = vxor.u32 %v315, 2147483648
  %v326 = vsel %vm324, %v325, %v316
  %v327 = vsel %vm320, %v323, %v326
  %v328 = vsel %vm317, nan, %v327
  %v329 = vand.u32 2147483647, %v224
  %vm330 = vcmp.le.f32.partialorder %v329, 0.7853982
  %vm331 = vcmp.lt.s32.totalorder %v224, 0
  %v332 = vand.u32 %v224, 2139095040
  %v333 = vshrl.u32 %v332, 23
  %v334 = vsub.s32 %v333, 127
  %v335 = vand.u32 2147483647, %v224
  %v336 = vand.u32 %v335, 8388607
  %v337 = vor.u32 %v336, 8388608
  %v338 = vsub.s32 0, %v337
  %v339 = vadd.s32 %v334, 1
  %vm340 = vcmp.gt.s32.totalorder %v339, 0
  %v341 = vsel %vm340, %v339, 0
  %v342 = vshrl.u32 %v341, 5
  %v343 = vand.u32 %v341, 31
  %v344 = vsub.s32 32, %v343
  %v345 = vshrl.u32 683565275, %v344
  %v346 = vshll.u32 683565275, %v343
  %v347 = vshrl.u32 2475754826, %v344
  %v348 = vor.u32 %v346, %v347
  %v349 = vshll.u32 2475754826, %v343
  %v350 = vshrl.u32 2131351028, %v344
  %v351 = vor.u32 %v349, %v350
  %v352 = vshll.u32 2131351028, %v343
  %v353 = vshrl.u32 2102212464, %v344
  %v354 = vor.u32 %v352, %v353
  %v355 = vshll.u32 2102212464, %v343
  %v356 = vshrl.u32 920167782, %v344
  %v357 = vor.u32 %v355, %v356
  %v358 = vshll.u32 920167782, %v343
  %v359 = vshrl.u32 1326507024, %v344
  %v360 = vor.u32 %v358, %v359
  %vm361 = vcmp.lt.s32.totalorder %v342, 1
  %vm362 = vcmp.lt.s32.totalorder %v342, 2
  %vm363 = vcmp.lt.s32.totalorder %v342, 3
  %vm364 = vcmp.lt.s32.totalorder %v342, 4
  %v365 = vsel %vm361, %v345, %v348
  %v366 = vsel %vm364, %v354, 2102212464
  %v367 = vsel %vm363, %v351, %v366
  %v368 = vsel %vm362, %v365, %v367
  %v369 = vsel %vm361, %v348, %v351
  %v370 = vsel %vm364, %v357, 920167782
  %v371 = vsel %vm363, %v354, %v370
  %v372 = vsel %vm362, %v369, %v371
  %v373 = vsel %vm361, %v351, %v354
  %v374 = vsel %vm364, %v360, 1326507024
  %v375 = vsel %vm363, %v357, %v374
  %v376 = vsel %vm362, %v373, %v375
  %v377 = vshll.u32 %v337, 8
  %v378 = vmul.u32.u64.compose %v377, %v376
  %v379 = vextract.low.u32 %v378
  %v380 = vextract.high.u32 %v378
  %v381 = vmul.u32.u64.compose %v377, %v372
  %v382 = vextract.low.u32 %v381
  %v383 = vextract.high.u32 %v381
  %v384 = vmul.u32 %v377, %v368
  %v385 = vadd.s32 %v380, %v382
  %vm386 = vc.u32 %v380, %v382
  %v387 = vadd.s32 %v383, 1
  %v388 = vsel %vm386, %v387, %v383
  %v389 = vadd.s32 %v384, %v388
  %v390 = vadd.s32 %v389, 536870912
  %v391 = vshrl.u32 %v390, 30
  %v392 = vshll.u32 %v391, 30
  %v393 = vsub.s32 %v389, %v392
  %vm394 = vcmp.lt.s32.totalorder %v393, 0
  %v395 = vsub.s32 0, %v393
  %v396 = vsel %vm394, %v395, %v393
  %v397 = vclz %v396
  %v398 = vsub.s32 %v397, 2
  %vm399 = vcmp.gt.s32.totalorder 0, %v398
  %v400 = vsel %vm399, 0, %v398
  %v401 = vsub.s32 32, %v400
  %v402 = vshll.u32 %v393, %v400
  %v403 = vshrl.u32 %v385, %v401
  %v404 = vor.u32 %v402, %v403
  %v405 = vsub.s32 4294967266, %v400
  %v406 = vadd.s32 %v405, 127
  %v407 = vshll.u32 %v406, 23
  %v408 = vor.u32 4788187, %v407
  %v409 = vand.u32 2147483647, %v408
  %v411 = vcvt.s32.f32 %v404
  %v412 = vmul.f32 %v411, %v409
  %v413 = vxor.u32 %v412, 2147483648
  %v414 = vsel %vm331, %v413, %v412
  %v415 = vsub.s32 4, %v391
  %v416 = vsel %vm331, %v415, %v391
  %v417 = vsel %vm330, %v224, %v414
  %v418 = vsel %vm330, 0, %v416
  %v419 = vcosq.f32.pop %v417
  %v420 = vsinq.f32.pop %v417
  %vm421 = vweird.f32 %v224
  %v422 = vadd.s32 %v418, 3
  %v423 = vand.u32 %v422, 3
  %vm424 = vcmp.lt.s32.totalorder %v423, 2
  %vm425 = vcmp.eq.s32.totalorder %v423, 0
  %v426 = vxor.u32 %v420, 2147483648
  %v427 = vsel %vm425, %v419, %v426
  %vm428 = vcmp.eq.s32.totalorder %v423, 2
  %v429 = vxor.u32 %v419, 2147483648
  %v430 = vsel %vm428, %v429, %v420
  %v431 = vsel %vm424, %v427, %v430
  %v432 = vsel %vm421, nan, %v431
  %v433 = vmul.f32 %v115, %v328
  %v434 = vmul.f32 %v219, %v432
  %v435 = vsub.f32 0.0, %v433
  %v436 = vsub.f32 0.0, %v434
  %437 = vst [vmem:[%s1] sm:$0xff] %v435
  %438 = vst [vmem:[%s1 + $0x8] sm:$0xff] %v436
  // Predicated region
  $region6: #{dnn_forward.1} parent=0 // pred_check
    _
  $region7: #{dnn_forward.1} parent=0 // pred_check_branch
    %440 = sbr.rel (0) target = $region9
  $region8: #{dnn_forward.1} parent=0 // pred_region
    _
  $region9: #{dnn_forward.1} parent=0 // pred_fallthru
    _
  // Predicated region
  $region10: #{dnn_forward.1} parent=0 // pred_check
    _
  $region11: #{dnn_forward.1} parent=0 // pred_check_branch
    %442 = sbr.rel (0) target = $region13
  $region12: #{dnn_forward.1} parent=0 // pred_region
    _
  $region13: #{dnn_forward.1} parent=0 // pred_fallthru
    _

</llo_original>
